<compile_context>
chip_gen: v6e
topology: v6e:2x2x1
jax: 0.10.0
libtpu: 0.0.40
codegen_flags: <defaults>
</compile_context>

<pallas_src>
import jax
import jax.numpy as jnp
from jax import lax
from jax.experimental import pallas as pl
from jax.experimental.pallas import tpu as pltpu


def _round_up(x, m):
    return ((x + m - 1) // m) * m


# ----------------------------- forward kernel ------------------------------ #
def _linear_kernel(x_ref, w_ref, b_ref, o_ref):
    x = x_ref[...]                       # (S_pad, H_pad)
    w = w_ref[...]                       # (O_pad, H_pad)  -- PyTorch nn.Linear layout
    # Contract on the shared last axis of both operands: no XLU transpose, straight
    # to the MXU with an f32 accumulator.
    y = lax.dot_general(
        x, w,
        dimension_numbers=(((1,), (1,)), ((), ())),
        preferred_element_type=jnp.float32,
    )                                    # (S_pad, O_pad), lane-dense
    o_ref[...] = (y + b_ref[...]).astype(o_ref.dtype)


def linear_forward(x, w, b):
    """y = x @ w.T + b  (nn.Linear forward), padded to MXU/lane-friendly shapes."""
    S, H = x.shape
    O = w.shape[0]
    S_pad = _round_up(S, 8)              # sublanes
    H_pad = _round_up(H, 128)            # lanes (contraction axis)
    O_pad = _round_up(O, 128)            # lanes (output axis -> unmasked vst)

    x_pad = jnp.zeros((S_pad, H_pad), x.dtype).at[:S, :H].set(x)
    w_pad = jnp.zeros((O_pad, H_pad), w.dtype).at[:O, :H].set(w)
    b_pad = jnp.zeros((1, O_pad), b.dtype).at[0, :O].set(b)

    cost = pl.CostEstimate(
        flops=2 * S_pad * H_pad * O_pad,
        transcendentals=0,
        bytes_accessed=4 * (S_pad * H_pad + O_pad * H_pad + O_pad + S_pad * O_pad),
    )

    y_pad = pl.pallas_call(
        _linear_kernel,
        out_shape=jax.ShapeDtypeStruct((S_pad, O_pad), x.dtype),
        grid=(1,),
        in_specs=[
            pl.BlockSpec((S_pad, H_pad), lambda i: (0, 0)),
            pl.BlockSpec((O_pad, H_pad), lambda i: (0, 0)),
            pl.BlockSpec((1, O_pad), lambda i: (0, 0)),
        ],
        out_specs=pl.BlockSpec((S_pad, O_pad), lambda i: (0, 0)),
        cost_estimate=cost,
    )(x_pad, w_pad, b_pad)

    return y_pad[:S, :O]


# ------------------------- gradient-reduction kernel ------------------------ #
def _bucket_allreduce_kernel(g_ref, o_ref):
    # Semantics of reduction_fn's bucket step:
    #   grads_batch_coalesced /= world_size
    #   all_reduce(grads_batch_coalesced)   (sum over workers)
    # == mean over workers.  Sum is an unrolled chain of full-width VPU adds over the
    # worker (sublane) rows -- no cross-sublane XLU reduce -- and the 1/world scale is
    # applied once to the f32 accumulator.
    W = g_ref.shape[0]
    acc = g_ref[pl.ds(0, 1), :].astype(jnp.float32)     # (1, TILE_N)
    for w in range(1, W):                               # static unroll, small W
        acc = acc + g_ref[pl.ds(w, 1), :].astype(jnp.float32)
    o_ref[...] = (acc * (1.0 / W)).astype(o_ref.dtype)


# Max tile width (f32 columns).  For W=4: 4*TILE_N*4B = 1 MiB per input buffer
# (x2 double-buffered) + 256 KiB per output buffer -- comfortably inside the
# 32 MiB scoped-VMEM budget of v7x's 64 MiB VMEM while still ~HBM-roofline wide.
_MAX_TILE_N = 64 * 1024


def bucket_allreduce(flat_grads_per_worker, tile_n=None):
    """(world_size, N) flattened bucket -> (N,) reduced bucket (mean over workers)."""
    W, N = flat_grads_per_worker.shape
    dtype = flat_grads_per_worker.dtype

    # Pad the bucket length to a lane-dense multiple of the tile width so every block
    # (and every store) is a full, unmasked (W, TILE_N)/(1, TILE_N) rectangle.
    n128 = _round_up(N, 128)
    if tile_n is None:
        tile_n = min(n128, _MAX_TILE_N)
    tile_n = _round_up(tile_n, 128)
    n_pad = _round_up(n128, tile_n)

    flat_pad = jnp.zeros((W, n_pad), dtype).at[:, :N].set(flat_grads_per_worker)

    grid = (n_pad // tile_n,)
    cost = pl.CostEstimate(
        flops=W * n_pad,
        transcendentals=0,
        bytes_accessed=(W + 1) * n_pad * 4,
    )

    reduced_pad = pl.pallas_call(
        _bucket_allreduce_kernel,
        out_shape=jax.ShapeDtypeStruct((1, n_pad), dtype),
        grid=grid,
        in_specs=[pl.BlockSpec((W, tile_n), lambda i: (0, i))],
        out_specs=pl.BlockSpec((1, tile_n), lambda i: (0, i)),
        compiler_params=pltpu.CompilerParams(
            dimension_semantics=("parallel",),        # shard N-tiles across TCs (v7x)
            vmem_limit_bytes=32 * 1024 * 1024,
        ),
        cost_estimate=cost,
    )(flat_pad)

    return reduced_pad[0, :N]


# ------------------------------ DDP wrapper --------------------------------- #
class LegacyDistributedDataParallelPallas:
    """Mirror of fairseq's LegacyDistributedDataParallel (forward + reduction_fn)."""

    def __init__(self, params, world_size, bucket_cap_mb=256):
        self.params = params                      # {"w": (O,H), "b": (O,)}
        self.world_size = world_size
        self.need_reduction = False
        MB = 1024 * 1024
        self.reduce_bucket_size = bucket_cap_mb * MB

    def forward(self, x):
        self.need_reduction = True
        return linear_forward(x, self.params["w"], self.params["b"])

    def reduce_grads(self, per_worker_grads):
        """per_worker_grads: list (len world_size) of {"w": ..., "b": ...}."""
        if not self.need_reduction:
            return None
        self.need_reduction = False
        shapes = [(k, self.params[k].shape, self.params[k].size)
                  for k in ("w", "b")]
        # _flatten_dense_tensors per worker (single bucket here: < reduce_bucket_size).
        # The tiled kernel streams (W, TILE_N) blocks, so buckets far larger than VMEM
        # are handled by the same call.
        # TODO(synk): for very large buckets, reduce each parameter tensor in place
        #             (input_output_aliases) instead of materializing this coalesced copy.
        flat = jnp.stack([
            jnp.concatenate([g[k].reshape(-1) for k, _, _ in shapes])
            for g in per_worker_grads
        ])                                                     # (world_size, N)
        reduced_flat = bucket_allreduce(flat)                  # Pallas kernel
        # _unflatten_dense_tensors
        out, off = {}, 0
        for k, shp, n in shapes:
            out[k] = reduced_flat[off:off + n].reshape(shp)
            off += n
        return out


# ---------------------------------- main ------------------------------------ #
if __name__ == "__main__":
    key = jax.random.PRNGKey(0)
    kx, kw, kb, kg = jax.random.split(key, 4)

    SEQ, HIDDEN = 8, 32
    WORLD_SIZE = 4

    # Deterministic parameters of the wrapped "module" (nn.Linear(32, 32)).
    w = jax.random.normal(kw, (HIDDEN, HIDDEN), dtype=jnp.float32) * 0.02
    b = jax.random.normal(kb, (HIDDEN,), dtype=jnp.float32) * 0.02
    x = jax.random.normal(kx, (SEQ, HIDDEN), dtype=jnp.float32)

    ddp = LegacyDistributedDataParallelPallas({"w": w, "b": b}, world_size=WORLD_SIZE)

    # forward(): just the wrapped module's forward (Pallas matmul kernel).
    y = ddp.forward(x)
    y = jax.block_until_ready(y)

    # Check against the plain-JAX reference for the forward path.
    y_ref = x @ w.T + b
    assert jnp.allclose(y, y_ref, atol=1e-5), "forward mismatch"

    # Exercise the gradient-reduction hook path with synthetic per-worker grads.
    gkeys = jax.random.split(kg, WORLD_SIZE)
    per_worker_grads = [
        {"w": jax.random.normal(k, (HIDDEN, HIDDEN), dtype=jnp.float32),
         "b": jax.random.normal(k, (HIDDEN,), dtype=jnp.float32)}
        for k in gkeys
    ]
    reduced = ddp.reduce_grads(per_worker_grads)
    reduced = jax.tree_util.tree_map(jax.block_until_ready, reduced)

    ref_w = sum(g["w"] for g in per_worker_grads) / WORLD_SIZE
    ref_b = sum(g["b"] for g in per_worker_grads) / WORLD_SIZE
    assert jnp.allclose(reduced["w"], ref_w, atol=1e-5), "grad reduce mismatch (w)"
    assert jnp.allclose(reduced["b"], ref_b, atol=1e-5), "grad reduce mismatch (b)"

    print("KERNEL_OK")
</pallas_src>

<mosaic_0001>
module attributes {stable_mosaic.version = 11 : i64} {
  func.func @_linear_kernel(%arg0: i32, %arg1: memref<8x128xf32, #tpu.memory_space<vmem>>, %arg2: memref<128x128xf32, #tpu.memory_space<vmem>>, %arg3: memref<1x128xf32, #tpu.memory_space<vmem>>, %arg4: memref<8x128xf32, #tpu.memory_space<vmem>>) attributes {dimension_semantics = [#tpu.dimension_semantics<arbitrary>], iteration_bounds = array<i64: 1>, scalar_prefetch = 0 : i64, scratch_operands = 0 : i64, tpu.core_type = #tpu.core_type<tc>, window_params = [{pipeline_mode = #tpu.pipeline_mode<synchronous>, transform_indices = @transform_0, window_bounds = array<i64: 8, 128>}, {pipeline_mode = #tpu.pipeline_mode<synchronous>, transform_indices = @transform_1, window_bounds = array<i64: 128, 128>}, {pipeline_mode = #tpu.pipeline_mode<synchronous>, transform_indices = @transform_2, window_bounds = array<i64: 1, 128>}, {pipeline_mode = #tpu.pipeline_mode<synchronous>, transform_indices = @transform_3, window_bounds = array<i64: 8, 128>}]} {
    %c0 = arith.constant 0 : index
    %c0_0 = arith.constant 0 : index
    %0 = vector.load %arg1[%c0, %c0_0] : memref<8x128xf32, #tpu.memory_space<vmem>>, vector<8x128xf32>
    %c0_1 = arith.constant 0 : index
    %c0_2 = arith.constant 0 : index
    %1 = vector.load %arg2[%c0_1, %c0_2] : memref<128x128xf32, #tpu.memory_space<vmem>>, vector<128x128xf32>
    %cst = arith.constant dense<0.000000e+00> : vector<8x128xf32>
    %2 = tpu.matmul %0, %1, %cst {dimension_numbers = #tpu.dot_dimension_numbers<[1], [1], [0], [0], [0, 0, 1, 0], [], []>} : vector<8x128xf32>, vector<128x128xf32>, vector<8x128xf32> -> vector<8x128xf32>
    %c0_3 = arith.constant 0 : index
    %c0_4 = arith.constant 0 : index
    %3 = vector.load %arg3[%c0_3, %c0_4] : memref<1x128xf32, #tpu.memory_space<vmem>>, vector<1x128xf32>
    %4 = vector.broadcast %3 : vector<1x128xf32> to vector<8x128xf32>
    %5 = arith.addf %2, %4 : vector<8x128xf32>
    %c0_5 = arith.constant 0 : index
    %c0_6 = arith.constant 0 : index
    %6 = vector.load %arg4[%c0_5, %c0_6] : memref<8x128xf32, #tpu.memory_space<vmem>>, vector<8x128xf32>
    tpu.vector_store %arg4[%c0_5, %c0_6], %5 {strides = array<i32>} : memref<8x128xf32, #tpu.memory_space<vmem>>, vector<8x128xf32>,
    return
  }
  func.func @transform_0(%arg0: i32) -> (i32, i32) {
    %c0_i32 = arith.constant 0 : i32
    %c0_i32_0 = arith.constant 0 : i32
    %c0_i32_1 = arith.constant 0 : i32
    return %c0_i32, %c0_i32_0 : i32, i32
  }
  func.func @transform_1(%arg0: i32) -> (i32, i32) {
    %c0_i32 = arith.constant 0 : i32
    %c0_i32_0 = arith.constant 0 : i32
    %c0_i32_1 = arith.constant 0 : i32
    return %c0_i32, %c0_i32_0 : i32, i32
  }
  func.func @transform_2(%arg0: i32) -> (i32, i32) {
    %c0_i32 = arith.constant 0 : i32
    %c0_i32_0 = arith.constant 0 : i32
    %c0_i32_1 = arith.constant 0 : i32
    return %c0_i32, %c0_i32_0 : i32, i32
  }
  func.func @transform_3(%arg0: i32) -> (i32, i32) {
    %c0_i32 = arith.constant 0 : i32
    %c0_i32_0 = arith.constant 0 : i32
    %c0_i32_1 = arith.constant 0 : i32
    return %c0_i32, %c0_i32_0 : i32, i32
  }
}

</mosaic_0001>

<llo_original>
// kernel: tpu_custom_call.1
$region0: #{tpu_custom_call.1}
  #allocation0 [shape = 'u32[]', space=smem, size = 0x4, offset = 0x4, fixed_abs, tag = 'smem constant byte address 0x4 - core index']
  #allocation1 [shape = 'u32[144,128]{1,0:T(1,128)}', space=vmem, size = 0x12000, scoped, tag = 'internal scratch']
  %s0 = inlined_call_operand.hbm [shape: f32[8,128], index: 0, kind: input, shape index: {}]
  %s1 = inlined_call_operand.hbm [shape: f32[128,128], index: 1, kind: input, shape index: {}]
  %s2 = inlined_call_operand.vmem [shape: f32[1,128], index: 2, kind: input, shape index: {}]
  %s3 = inlined_call_operand.hbm [shape: f32[8,128], index: 3, kind: output, shape index: {}]
  %s4 = sld [smem:[#allocation0]]
  $region30: #{tpu_custom_call.1} parent=0
    _
  %s6 = ssub.s32 1, %s4
  %s7 = scalar_select 0, %s6, %s4
  $region1: #{tpu_custom_call.1} parent=0
    #allocation2 [shape = 'u8[4096]{0}', space=vmem, size = 0x1000, scoped, tag = 'input window, operand 0, single buffered']
    #allocation3 [shape = 's32[1]{0}', space=sflag, size = 0x4, scoped, tag = 'scoped memory for tpu_custom_call.1']
    #allocation4 [shape = 's32[1]{0}', space=sflag, size = 0x4, scoped, tag = 'scoped memory for tpu_custom_call.1']
    #allocation5 [shape = 'u8[65536]{0}', space=vmem, size = 0x10000, scoped, tag = 'input window, operand 1, single buffered']
    #allocation6 [shape = 's32[1]{0}', space=sflag, size = 0x4, scoped, tag = 'scoped memory for tpu_custom_call.1']
    #allocation7 [shape = 'u8[4096]{0}', space=vmem, size = 0x1000, scoped, tag = 'output window, operand 0, single buffered']
    %8 = vsyncpa [#allocation3], 0
    %9 = vsyncpa [#allocation6], 0
    %10 = vsyncpa [#allocation4], 0
    // Predicated region
    $region2: #{tpu_custom_call.1} parent=1 // pred_check
      _
    $region3: #{tpu_custom_call.1} parent=1 // pred_check_branch
      %12 = sbr.rel (0) target = $region5
    $region4: #{tpu_custom_call.1} parent=1 // pred_region
      %s14 = ssub.s32 128, 128
      %15 = vsyncadd [#allocation3], %s14
      %s17 = sshll.u32 [#allocation2], 4
      %s18 = int_to_ptr.vmem [resolvable:$true] %s17
      %20 = dma.hbm_to_vmem [thread:$0]  %s0, 128, %s18, [#allocation3]
    $region5: #{tpu_custom_call.1} parent=1 // pred_fallthru
      _
    // Predicated region
    $region6: #{tpu_custom_call.1} parent=1 // pred_check
      _
    $region7: #{tpu_custom_call.1} parent=1 // pred_check_branch
      %22 = sbr.rel (0) target = $region9
    $region8: #{tpu_custom_call.1} parent=1 // pred_region
      %s24 = ssub.s32 2048, 2048
      %25 = vsyncadd [#allocation6], %s24
      %s26 = sshll.u32 [#allocation5], 4
      %s27 = int_to_ptr.vmem [resolvable:$true] %s26
      %32 = dma.hbm_to_vmem [thread:$0]  %s1, 2048, %s27, [#allocation6], 128, 128, 8
    $region9: #{tpu_custom_call.1} parent=1 // pred_fallthru
      _
    // Predicated region
    $region10: #{tpu_custom_call.1} parent=1 // pred_check
      _
    $region11: #{tpu_custom_call.1} parent=1 // pred_check_branch
      %34 = sbr.rel (0) target = $region13
    $region12: #{tpu_custom_call.1} parent=1 // pred_region
      _
    $region13: #{tpu_custom_call.1} parent=1 // pred_fallthru
      _
    // Predicated region
    $region14: #{tpu_custom_call.1} parent=1 // pred_check
      _
    $region15: #{tpu_custom_call.1} parent=1 // pred_check_branch
      %36 = sbr.rel (0) target = $region17
    $region16: #{tpu_custom_call.1} parent=1 // pred_region
      %37 = dma.done [#allocation3], 128
    $region17: #{tpu_custom_call.1} parent=1 // pred_fallthru
      _
    // Predicated region
    $region18: #{tpu_custom_call.1} parent=1 // pred_check
      _
    $region19: #{tpu_custom_call.1} parent=1 // pred_check_branch
      %39 = sbr.rel (0) target = $region21
    $region20: #{tpu_custom_call.1} parent=1 // pred_region
      %40 = dma.done [#allocation6], 2048
    $region21: #{tpu_custom_call.1} parent=1 // pred_fallthru
      _
    %v41 = vld [vmem:[#allocation2] sm:$0xff]
    %v42 = vld [vmem:[#allocation5] sm:$0xff]
    %v43 = vld [vmem:[#allocation5 + $0x8] sm:$0xff]
    %v44 = vld [vmem:[#allocation5 + $0x10] sm:$0xff]
    %v45 = vld [vmem:[#allocation5 + $0x18] sm:$0xff]
    %v46 = vld [vmem:[#allocation5 + $0x20] sm:$0xff]
    %v47 = vld [vmem:[#allocation5 + $0x28] sm:$0xff]
    %v48 = vld [vmem:[#allocation5 + $0x30] sm:$0xff]
    %v49 = vld [vmem:[#allocation5 + $0x38] sm:$0xff]
    %v50 = vld [vmem:[#allocation5 + $0x40] sm:$0xff]
    %v51 = vld [vmem:[#allocation5 + $0x48] sm:$0xff]
    %v52 = vld [vmem:[#allocation5 + $0x50] sm:$0xff]
    %v53 = vld [vmem:[#allocation5 + $0x58] sm:$0xff]
    %v54 = vld [vmem:[#allocation5 + $0x60] sm:$0xff]
    %v55 = vld [vmem:[#allocation5 + $0x68] sm:$0xff]
    %v56 = vld [vmem:[#allocation5 + $0x70] sm:$0xff]
    %v57 = vld [vmem:[#allocation5 + $0x78] sm:$0xff]
    %v58 = vld [vmem:[%s2] sm:$0x1]
    %v60 = vlaneseq
    %v61 = vshrl.u32 %v60, 7
    %v62 = vsub.s32 0, %v61
    %v63 = vrot.slane %v58, %v62
    %65 = vmatprep.subr.mxu0 0.0
    %66 = vmatpush1.xpose.msra.mxu0 %v57
    %67 = vmatprep.subr.mxu0 0.0
    %68 = vmatpush1.xpose.msra.mxu0 %v56
    %69 = vmatprep.subr.mxu0 0.0
    %70 = vmatpush1.xpose.msra.mxu0 %v55
    %71 = vmatprep.subr.mxu0 0.0
    %72 = vmatpush1.xpose.msra.mxu0 %v54
    %73 = vmatprep.subr.mxu0 0.0
    %74 = vmatpush1.xpose.msra.mxu0 %v53
    %75 = vmatprep.subr.mxu0 0.0
    %76 = vmatpush1.xpose.msra.mxu0 %v52
    %77 = vmatprep.subr.mxu0 0.0
    %78 = vmatpush1.xpose.msra.mxu0 %v51
    %79 = vmatprep.subr.mxu0 0.0
    %80 = vmatpush1.xpose.msra.mxu0 %v50
    %81 = vmatprep.subr.mxu0 0.0
    %82 = vmatpush1.xpose.msra.mxu0 %v49
    %83 = vmatprep.subr.mxu0 0.0
    %84 = vmatpush1.xpose.msra.mxu0 %v48
    %85 = vmatprep.subr.mxu0 0.0
    %86 = vmatpush1.xpose.msra.mxu0 %v47
    %87 = vmatprep.subr.mxu0 0.0
    %88 = vmatpush1.xpose.msra.mxu0 %v46
    %89 = vmatprep.subr.mxu0 0.0
    %90 = vmatpush1.xpose.msra.mxu0 %v45
    %91 = vmatprep.subr.mxu0 0.0
    %92 = vmatpush1.xpose.msra.mxu0 %v44
    %93 = vmatprep.subr.mxu0 0.0
    %94 = vmatpush1.xpose.msra.mxu0 %v43
    %95 = vmatprep.subr.mxu0 0.0
    %96 = vmatpush1.xpose.msra.mxu0 %v42
    %97 = vmatprep.subr.mxu0 0.0
    %98 = vmatpush2.xpose.msra.mxu0 0.0
    %99 = vmatprep.subr.mxu0 0.0
    %100 = vmatpush2.xpose.msra.mxu0 0.0
    %101 = vmatprep.subr.mxu0 0.0
    %102 = vmatpush2.xpose.msra.mxu0 0.0
    %103 = vmatprep.subr.mxu0 0.0
    %104 = vmatpush2.xpose.msra.mxu0 0.0
    %105 = vmatprep.subr.mxu0 0.0
    %106 = vmatpush2.xpose.msra.mxu0 0.0
    %107 = vmatprep.subr.mxu0 0.0
    %108 = vmatpush2.xpose.msra.mxu0 0.0
    %109 = vmatprep.subr.mxu0 0.0
    %110 = vmatpush2.xpose.msra.mxu0 0.0
    %111 = vmatprep.subr.mxu0 0.0
    %112 = vmatpush2.xpose.msra.mxu0 0.0
    %113 = vmatprep.subr.mxu0 0.0
    %114 = vmatpush2.xpose.msra.mxu0 0.0
    %115 = vmatprep.subr.mxu0 0.0
    %116 = vmatpush2.xpose.msra.mxu0 0.0
    %117 = vmatprep.subr.mxu0 0.0
    %118 = vmatpush2.xpose.msra.mxu0 0.0
    %119 = vmatprep.subr.mxu0 0.0
    %120 = vmatpush2.xpose.msra.mxu0 0.0
    %121 = vmatprep.subr.mxu0 0.0
    %122 = vmatpush2.xpose.msra.mxu0 0.0
    %123 = vmatprep.subr.mxu0 0.0
    %124 = vmatpush2.xpose.msra.mxu0 0.0
    %125 = vmatprep.subr.mxu0 0.0
    %126 = vmatpush2.xpose.msra.mxu0 0.0
    %127 = vmatprep.subr.mxu0 0.0
    %128 = vmatpush2.xpose.msra.mxu0 0.0
    %129 = vmatprep.mubr.f32.mxu0 0.0
    %130 = vmatmul.mubr.f32.gmra.mxu0 %v41
    %v131 = vpop.f32.mrf.mxu0
    %v132 = vadd.f32 %v63, %v131
    %v133 = vpop.f32.mrf.mxu0
    %134 = vdwg.mxu0
    %135 = vst [vmem:[#allocation7] sm:$0xff] %v132
    // Predicated region
    $region22: #{tpu_custom_call.1} parent=1 // pred_check
      _
    $region23: #{tpu_custom_call.1} parent=1 // pred_check_branch
      %137 = sbr.rel (0) target = $region25
    $region24: #{tpu_custom_call.1} parent=1 // pred_region
      %s139 = ssub.s32 128, 128
      %140 = vsyncadd [#allocation4], %s139
      %s142 = sshll.u32 [#allocation7], 4
      %s143 = int_to_ptr.vmem [resolvable:$true] %s142
      %145 = dma.vmem_to_hbm [thread:$0]  %s143, 128, %s3, [#allocation4]
    $region25: #{tpu_custom_call.1} parent=1 // pred_fallthru
      _
    // Predicated region
    $region26: #{tpu_custom_call.1} parent=1 // pred_check
      _
    $region27: #{tpu_custom_call.1} parent=1 // pred_check_branch
      %147 = sbr.rel (0) target = $region29
    $region28: #{tpu_custom_call.1} parent=1 // pred_region
      %148 = dma.done [#allocation4], 128
    $region29: #{tpu_custom_call.1} parent=1 // pred_fallthru
      _
    %149 = vsyncpa [#allocation3], 1
    %150 = vsyncpa [#allocation6], 1
    %151 = vsyncpa [#allocation4], 1

</llo_original>
